<compile_context>
chip_gen: v6e
topology: v6e:2x2x1
jax: 0.10.0
libtpu: 0.0.40
codegen_flags: <defaults>
</compile_context>

<pallas_src>
import functools

import jax
import jax.numpy as jnp
from jax.experimental import pallas as pl
from jax.experimental.pallas import tpu as pltpu

LN_EPS = 1e-5  # torch.nn.LayerNorm default
_MIB = 1024 * 1024


@functools.lru_cache(maxsize=1)
def _vmem_limit_bytes():
    """Scoped-VMEM limit to request: half of physical VMEM on this chip."""
    try:
        cap = int(pltpu.get_tpu_info().vmem_capacity_bytes)
    except Exception:
        cap = 64 * _MIB  # conservative fallback (v7x per-TensorCore VMEM)
    return int(max(16 * _MIB, cap // 2))


def _pick_row_tile(rows, hidden, itemsize, n_streams):
    """Largest row tile whose double-buffered streams fit the VMEM budget."""
    budget = _vmem_limit_bytes() - 4 * _MIB        # headroom (gamma/beta, scratch)
    per_row = n_streams * 2 * hidden * itemsize    # 2 = double buffering
    cap = max(16, (budget // max(per_row, 1)) // 16 * 16)
    rows_aligned = ((rows + 15) // 16) * 16        # multiple of 16 (bf16 packing)
    # 2048 rows is already ~roofline; also keeps >1 grid step on large inputs
    # so the "parallel" axis can be sharded across v7x's two TensorCores.
    return int(min(cap, 2048, rows_aligned))


def _layernorm_rows(y, gamma, beta):
    """LayerNorm over the last axis (biased variance, single pass, f32 math)."""
    y32 = y.astype(jnp.float32)
    inv_h = 1.0 / y32.shape[-1]
    mean = jnp.sum(y32, axis=-1, keepdims=True) * inv_h
    meansq = jnp.sum(y32 * y32, axis=-1, keepdims=True) * inv_h
    var = jnp.maximum(meansq - mean * mean, 0.0)
    return (y32 - mean) * jax.lax.rsqrt(var + LN_EPS) * gamma + beta


def _residual_kernel(x_ref, out_ref, gamma_ref, beta_ref, o_ref):
    normed = _layernorm_rows(out_ref[...], gamma_ref[...], beta_ref[...])
    # dropout == identity (eval mode)
    o_ref[...] = (x_ref[...].astype(jnp.float32) + normed).astype(o_ref.dtype)


def _nores_kernel(out_ref, gamma_ref, beta_ref, o_ref):
    normed = _layernorm_rows(out_ref[...], gamma_ref[...], beta_ref[...])
    o_ref[...] = normed.astype(o_ref.dtype)


@functools.partial(jax.jit, static_argnames=("row_tile", "vmem_limit"))
def _sublayer_2d(x2d, out2d, gamma, beta, *, row_tile, vmem_limit):
    rows, hidden = out2d.shape
    grid = (rows // row_tile,)  # rows is pre-padded to a multiple of row_tile
    row_spec = pl.BlockSpec((row_tile, hidden), lambda i: (i, 0))
    par_spec = pl.BlockSpec((1, hidden), lambda i: (0, 0))
    cp = pltpu.CompilerParams(
        dimension_semantics=("parallel",),
        vmem_limit_bytes=vmem_limit,
    )
    if x2d is None:
        return pl.pallas_call(
            _nores_kernel,
            out_shape=jax.ShapeDtypeStruct((rows, hidden), out2d.dtype),
            grid=grid,
            in_specs=[row_spec, par_spec, par_spec],
            out_specs=row_spec,
            compiler_params=cp,
        )(out2d, gamma, beta)
    return pl.pallas_call(
        _residual_kernel,
        out_shape=jax.ShapeDtypeStruct((rows, hidden), out2d.dtype),
        grid=grid,
        in_specs=[row_spec, row_spec, par_spec, par_spec],
        out_specs=row_spec,
        compiler_params=cp,
    )(x2d, out2d, gamma, beta)


def sublayer_connection(x, outputs, gamma, beta):
    """JAX/Pallas equivalent of SublayerConnection.forward(x, outputs).

    x: (B, S, H) or None; outputs: (B, S, H); gamma/beta: (H,).
    I/O dtype follows `outputs` (f32 or bf16); math is f32 inside the kernel.
    """
    B, S, H = outputs.shape
    rows = B * S
    n_streams = 2 if x is None else 3  # row-tiled HBM streams (in + out)
    itemsize = jnp.dtype(outputs.dtype).itemsize
    row_tile = _pick_row_tile(rows, H, itemsize, n_streams)
    rows_padded = ((rows + row_tile - 1) // row_tile) * row_tile

    out2d = outputs.reshape(rows, H)
    x2d = None if x is None else x.reshape(rows, H)
    if rows_padded != rows:
        pad = rows_padded - rows
        out2d = jnp.pad(out2d, ((0, pad), (0, 0)))
        if x2d is not None:
            x2d = jnp.pad(x2d, ((0, pad), (0, 0)))

    # Hoist gamma/beta cast: done once here, kernel uses them directly in f32.
    g2d = gamma.astype(jnp.float32).reshape(1, H)
    b2d = beta.astype(jnp.float32).reshape(1, H)

    res = _sublayer_2d(
        x2d, out2d, g2d, b2d, row_tile=row_tile, vmem_limit=_vmem_limit_bytes()
    )
    return res[:rows].reshape(B, S, H)


def _reference(x, outputs, gamma, beta):
    y = outputs.astype(jnp.float32)
    mean = jnp.mean(y, axis=-1, keepdims=True)
    var = jnp.mean((y - mean) ** 2, axis=-1, keepdims=True)
    normed = (y - mean) / jnp.sqrt(var + LN_EPS) * gamma + beta
    if x is None:
        return normed.astype(outputs.dtype)
    return (x.astype(jnp.float32) + normed).astype(outputs.dtype)


if __name__ == "__main__":
    key = jax.random.PRNGKey(0)
    k1, k2, k3, k4 = jax.random.split(key, 4)

    # Deterministic LayerNorm params (PyTorch init: weight=1, bias=0); slightly
    # non-trivial so scale/shift are exercised.
    B, S, H = 2, 8, 128
    x = jax.random.normal(k1, (B, S, H), dtype=jnp.float32)
    outputs = jax.random.normal(k2, (B, S, H), dtype=jnp.float32)
    gamma = 1.0 + 0.01 * jnp.arange(H, dtype=jnp.float32)
    beta = 0.001 * jnp.arange(H, dtype=jnp.float32)

    # Case 1: residual branch (x is not None)
    y = jax.block_until_ready(sublayer_connection(x, outputs, gamma, beta))
    assert jnp.allclose(y, _reference(x, outputs, gamma, beta),
                        atol=1e-5, rtol=1e-5), "residual mismatch"

    # Case 2: x is None branch
    y0 = jax.block_until_ready(sublayer_connection(None, outputs, gamma, beta))
    assert jnp.allclose(y0, _reference(None, outputs, gamma, beta),
                        atol=1e-5, rtol=1e-5), "no-residual mismatch"

    # Case 3: ragged rows + hidden not a multiple of 128 (pad-to-tile path)
    B2, S2, H2 = 3, 7, 96
    xr = jax.random.normal(k3, (B2, S2, H2), dtype=jnp.float32)
    outr = jax.random.normal(k4, (B2, S2, H2), dtype=jnp.float32)
    gr = 1.0 + 0.01 * jnp.arange(H2, dtype=jnp.float32)
    br = 0.001 * jnp.arange(H2, dtype=jnp.float32)
    yr = jax.block_until_ready(sublayer_connection(xr, outr, gr, br))
    assert jnp.allclose(yr, _reference(xr, outr, gr, br),
                        atol=1e-5, rtol=1e-5), "ragged mismatch"

    # Case 4: bf16 I/O at the HBM boundary (f32 math inside the kernel)
    xb = x.astype(jnp.bfloat16)
    ob = outputs.astype(jnp.bfloat16)
    yb = jax.block_until_ready(sublayer_connection(xb, ob, gamma, beta))
    yb_ref = _reference(xb, ob, gamma, beta)
    assert jnp.allclose(yb.astype(jnp.float32), yb_ref.astype(jnp.float32),
                        atol=2e-2, rtol=2e-2), "bf16 mismatch"

    print("KERNEL_OK")
</pallas_src>

<mosaic_0001>
module attributes {stable_mosaic.version = 11 : i64} {
  func.func @_residual_kernel(%arg0: i32, %arg1: memref<16x128xf32, #tpu.memory_space<vmem>>, %arg2: memref<16x128xf32, #tpu.memory_space<vmem>>, %arg3: memref<1x128xf32, #tpu.memory_space<vmem>>, %arg4: memref<1x128xf32, #tpu.memory_space<vmem>>, %arg5: memref<16x128xf32, #tpu.memory_space<vmem>>) attributes {dimension_semantics = [#tpu.dimension_semantics<parallel>], iteration_bounds = array<i64: 1>, scalar_prefetch = 0 : i64, scratch_operands = 0 : i64, tpu.core_type = #tpu.core_type<tc>, window_params = [{transform_indices = @transform_0, window_bounds = array<i64: 16, 128>}, {transform_indices = @transform_1, window_bounds = array<i64: 16, 128>}, {pipeline_mode = #tpu.pipeline_mode<synchronous>, transform_indices = @transform_2, window_bounds = array<i64: 1, 128>}, {pipeline_mode = #tpu.pipeline_mode<synchronous>, transform_indices = @transform_3, window_bounds = array<i64: 1, 128>}, {transform_indices = @transform_4, window_bounds = array<i64: 16, 128>}]} {
    %c0 = arith.constant 0 : index
    %c0_0 = arith.constant 0 : index
    %0 = vector.load %arg2[%c0, %c0_0] : memref<16x128xf32, #tpu.memory_space<vmem>>, vector<16x128xf32>
    %c0_1 = arith.constant 0 : index
    %c0_2 = arith.constant 0 : index
    %1 = vector.load %arg3[%c0_1, %c0_2] : memref<1x128xf32, #tpu.memory_space<vmem>>, vector<1x128xf32>
    %c0_3 = arith.constant 0 : index
    %c0_4 = arith.constant 0 : index
    %2 = vector.load %arg4[%c0_3, %c0_4] : memref<1x128xf32, #tpu.memory_space<vmem>>, vector<1x128xf32>
    %cst = arith.constant dense<0.000000e+00> : vector<16xf32>
    %3 = vector.multi_reduction <add>, %0, %cst [1] : vector<16x128xf32> to vector<16xf32>
    %4 = vector.shape_cast %3 : vector<16xf32> to vector<16x1xf32>
    %cst_5 = arith.constant 7.812500e-03 : f32
    %5 = vector.broadcast %cst_5 : f32 to vector<16x1xf32>
    %6 = arith.mulf %4, %5 : vector<16x1xf32>
    %7 = arith.mulf %0, %0 : vector<16x128xf32>
    %cst_6 = arith.constant dense<0.000000e+00> : vector<16xf32>
    %8 = vector.multi_reduction <add>, %7, %cst_6 [1] : vector<16x128xf32> to vector<16xf32>
    %9 = vector.shape_cast %8 : vector<16xf32> to vector<16x1xf32>
    %cst_7 = arith.constant 7.812500e-03 : f32
    %10 = vector.broadcast %cst_7 : f32 to vector<16x1xf32>
    %11 = arith.mulf %9, %10 : vector<16x1xf32>
    %12 = arith.mulf %6, %6 : vector<16x1xf32>
    %13 = arith.subf %11, %12 : vector<16x1xf32>
    %cst_8 = arith.constant 0.000000e+00 : f32
    %14 = vector.broadcast %cst_8 : f32 to vector<16x1xf32>
    %15 = arith.maximumf %13, %14 : vector<16x1xf32>
    %16 = vector.broadcast %6 : vector<16x1xf32> to vector<16x128xf32>
    %17 = arith.subf %0, %16 : vector<16x128xf32>
    %cst_9 = arith.constant 9.99999974E-6 : f32
    %18 = vector.broadcast %cst_9 : f32 to vector<16x1xf32>
    %19 = arith.addf %15, %18 : vector<16x1xf32>
    %20 = math.rsqrt %19 : vector<16x1xf32>
    %21 = vector.broadcast %20 : vector<16x1xf32> to vector<16x128xf32>
    %22 = arith.mulf %17, %21 : vector<16x128xf32>
    %23 = vector.broadcast %1 : vector<1x128xf32> to vector<16x128xf32>
    %24 = arith.mulf %22, %23 : vector<16x128xf32>
    %25 = vector.broadcast %2 : vector<1x128xf32> to vector<16x128xf32>
    %26 = arith.addf %24, %25 : vector<16x128xf32>
    %c0_10 = arith.constant 0 : index
    %c0_11 = arith.constant 0 : index
    %27 = vector.load %arg1[%c0_10, %c0_11] : memref<16x128xf32, #tpu.memory_space<vmem>>, vector<16x128xf32>
    %28 = arith.addf %27, %26 : vector<16x128xf32>
    %c0_12 = arith.constant 0 : index
    %c0_13 = arith.constant 0 : index
    %29 = vector.load %arg5[%c0_12, %c0_13] : memref<16x128xf32, #tpu.memory_space<vmem>>, vector<16x128xf32>
    tpu.vector_store %arg5[%c0_12, %c0_13], %28 {strides = array<i32>} : memref<16x128xf32, #tpu.memory_space<vmem>>, vector<16x128xf32>,
    return
  }
  func.func @transform_0(%arg0: i32) -> (i32, i32) {
    %c0_i32 = arith.constant 0 : i32
    %c0_i32_0 = arith.constant 0 : i32
    return %arg0, %c0_i32 : i32, i32
  }
  func.func @transform_1(%arg0: i32) -> (i32, i32) {
    %c0_i32 = arith.constant 0 : i32
    %c0_i32_0 = arith.constant 0 : i32
    return %arg0, %c0_i32 : i32, i32
  }
  func.func @transform_2(%arg0: i32) -> (i32, i32) {
    %c0_i32 = arith.constant 0 : i32
    %c0_i32_0 = arith.constant 0 : i32
    %c0_i32_1 = arith.constant 0 : i32
    return %c0_i32, %c0_i32_0 : i32, i32
  }
  func.func @transform_3(%arg0: i32) -> (i32, i32) {
    %c0_i32 = arith.constant 0 : i32
    %c0_i32_0 = arith.constant 0 : i32
    %c0_i32_1 = arith.constant 0 : i32
    return %c0_i32, %c0_i32_0 : i32, i32
  }
  func.func @transform_4(%arg0: i32) -> (i32, i32) {
    %c0_i32 = arith.constant 0 : i32
    %c0_i32_0 = arith.constant 0 : i32
    return %arg0, %c0_i32 : i32, i32
  }
}

</mosaic_0001>

<llo_original>
// kernel: _sublayer_2d.1
$region0: #{_sublayer_2d.1}
  #allocation0 [shape = 'u32[]', space=smem, size = 0x4, offset = 0x4, fixed_abs, tag = 'smem constant byte address 0x4 - core index']
  #allocation1 [shape = 'u32[144,128]{1,0:T(1,128)}', space=vmem, size = 0x12000, scoped, tag = 'internal scratch']
  %s0 = inlined_call_operand.hbm [shape: f32[16,128], index: 0, kind: input, shape index: {}]
  %s1 = inlined_call_operand.hbm [shape: f32[16,128], index: 1, kind: input, shape index: {}]
  %s2 = inlined_call_operand.vmem [shape: f32[1,128], index: 2, kind: input, shape index: {}]
  %s3 = inlined_call_operand.vmem [shape: f32[1,128], index: 3, kind: input, shape index: {}]
  %s4 = inlined_call_operand.hbm [shape: f32[16,128], index: 4, kind: output, shape index: {}]
  %s5 = sld [smem:[#allocation0]]
  $region34: #{_sublayer_2d.1} parent=0
    _
  %s7 = ssub.s32 1, %s5
  %s8 = scalar_select 0, %s7, %s5
  $region1: #{_sublayer_2d.1} parent=0
    #allocation2 [shape = 'u8[8192]{0}', space=vmem, size = 0x2000, scoped, tag = 'input window, operand 0, single buffered']
    #allocation3 [shape = 's32[1]{0}', space=sflag, size = 0x4, scoped, tag = 'scoped memory for _sublayer_2d.1']
    #allocation4 [shape = 's32[1]{0}', space=sflag, size = 0x4, scoped, tag = 'scoped memory for _sublayer_2d.1']
    #allocation5 [shape = 'u8[8192]{0}', space=vmem, size = 0x2000, scoped, tag = 'input window, operand 1, single buffered']
    #allocation6 [shape = 's32[1]{0}', space=sflag, size = 0x4, scoped, tag = 'scoped memory for _sublayer_2d.1']
    #allocation7 [shape = 'u8[8192]{0}', space=vmem, size = 0x2000, scoped, tag = 'output window, operand 0, single buffered']
    %9 = vsyncpa [#allocation3], 0
    %10 = vsyncpa [#allocation6], 0
    %11 = vsyncpa [#allocation4], 0
    // Predicated region
    $region2: #{_sublayer_2d.1} parent=1 // pred_check
      _
    $region3: #{_sublayer_2d.1} parent=1 // pred_check_branch
      %13 = sbr.rel (0) target = $region5
    $region4: #{_sublayer_2d.1} parent=1 // pred_region
      %s15 = ssub.s32 256, 256
      %16 = vsyncadd [#allocation3], %s15
      %s17 = sshll.u32 [#allocation2], 4
      %s18 = int_to_ptr.vmem [resolvable:$true] %s17
      %23 = dma.hbm_to_vmem [thread:$0]  %s0, 256, %s18, [#allocation3], 128, 128, 8
    $region5: #{_sublayer_2d.1} parent=1 // pred_fallthru
      _
    // Predicated region
    $region6: #{_sublayer_2d.1} parent=1 // pred_check
      _
    $region7: #{_sublayer_2d.1} parent=1 // pred_check_branch
      %25 = sbr.rel (0) target = $region9
    $region8: #{_sublayer_2d.1} parent=1 // pred_region
      %s27 = ssub.s32 256, 256
      %28 = vsyncadd [#allocation6], %s27
      %s29 = sshll.u32 [#allocation5], 4
      %s30 = int_to_ptr.vmem [resolvable:$true] %s29
      %35 = dma.hbm_to_vmem [thread:$0]  %s1, 256, %s30, [#allocation6], 128, 128, 8
    $region9: #{_sublayer_2d.1} parent=1 // pred_fallthru
      _
    // Predicated region
    $region10: #{_sublayer_2d.1} parent=1 // pred_check
      _
    $region11: #{_sublayer_2d.1} parent=1 // pred_check_branch
      %37 = sbr.rel (0) target = $region13
    $region12: #{_sublayer_2d.1} parent=1 // pred_region
      _
    $region13: #{_sublayer_2d.1} parent=1 // pred_fallthru
      _
    // Predicated region
    $region14: #{_sublayer_2d.1} parent=1 // pred_check
      _
    $region15: #{_sublayer_2d.1} parent=1 // pred_check_branch
      %39 = sbr.rel (0) target = $region17
    $region16: #{_sublayer_2d.1} parent=1 // pred_region
      _
    $region17: #{_sublayer_2d.1} parent=1 // pred_fallthru
      _
    // Predicated region
    $region18: #{_sublayer_2d.1} parent=1 // pred_check
      _
    $region19: #{_sublayer_2d.1} parent=1 // pred_check_branch
      %41 = sbr.rel (0) target = $region21
    $region20: #{_sublayer_2d.1} parent=1 // pred_region
      %42 = dma.done [#allocation3], 256
    $region21: #{_sublayer_2d.1} parent=1 // pred_fallthru
      _
    // Predicated region
    $region22: #{_sublayer_2d.1} parent=1 // pred_check
      _
    $region23: #{_sublayer_2d.1} parent=1 // pred_check_branch
      %44 = sbr.rel (0) target = $region25
    $region24: #{_sublayer_2d.1} parent=1 // pred_region
      %45 = dma.done [#allocation6], 256
    $region25: #{_sublayer_2d.1} parent=1 // pred_fallthru
      _
    %v46 = vld [vmem:[#allocation5] sm:$0xff]
    %v47 = vld [vmem:[#allocation5 + $0x8] sm:$0xff]
    %v48 = vld [vmem:[%s2] sm:$0x1]
    %v49 = vld [vmem:[%s3] sm:$0x1]
    %50 = vadd.xlane.f32.xlu0 %v46
    %v51 = vpop.xlane.xlu0 %50
    %52 = vadd.xlane.f32.xlu0 %v47
    %v53 = vpop.xlane.xlu0 %52
    %v54 = vmul.f32 %v51, 0.0078125
    %v55 = vmul.f32 %v53, 0.0078125
    %v56 = vmul.f32 %v46, %v46
    %v57 = vmul.f32 %v47, %v47
    %58 = vadd.xlane.f32.xlu0 %v56
    %v59 = vpop.xlane.xlu0 %58
    %60 = vadd.xlane.f32.xlu0 %v57
    %v61 = vpop.xlane.xlu0 %60
    %v62 = vmul.f32 %v59, 0.0078125
    %v63 = vmul.f32 %v61, 0.0078125
    %v64 = vmul.f32 %v54, %v54
    %v65 = vmul.f32 %v55, %v55
    %v66 = vsub.f32 %v62, %v64
    %v67 = vsub.f32 %v63, %v65
    %v68 = vmax.f32 %v66, 0.0
    %v69 = vmax.f32 %v67, 0.0
    %v70 = vsub.f32 %v46, %v54
    %v71 = vsub.f32 %v47, %v55
    %v72 = vadd.f32 %v68, 1e-05
    %v73 = vadd.f32 %v69, 1e-05
    %v74 = vrsqrt.pop %v72
    %v75 = vrsqrt.pop %v73
    %v76 = vmul.f32 %v70, %v74
    %v77 = vmul.f32 %v71, %v75
    %v79 = vlaneseq
    %v80 = vshrl.u32 %v79, 7
    %v81 = vsub.s32 0, %v80
    %v82 = vrot.slane %v48, %v81
    %v84 = vmul.f32 %v76, %v82
    %v85 = vmul.f32 %v77, %v82
    %v87 = vlaneseq
    %v88 = vshrl.u32 %v87, 7
    %v89 = vsub.s32 0, %v88
    %v90 = vrot.slane %v49, %v89
    %v92 = vadd.f32 %v84, %v90
    %v93 = vadd.f32 %v85, %v90
    %v94 = vld [vmem:[#allocation2] sm:$0xff]
    %v95 = vld [vmem:[#allocation2 + $0x8] sm:$0xff]
    %v96 = vadd.f32 %v94, %v92
    %v97 = vadd.f32 %v95, %v93
    %98 = vst [vmem:[#allocation7] sm:$0xff] %v96
    %99 = vst [vmem:[#allocation7 + $0x8] sm:$0xff] %v97
    // Predicated region
    $region26: #{_sublayer_2d.1} parent=1 // pred_check
      _
    $region27: #{_sublayer_2d.1} parent=1 // pred_check_branch
      %101 = sbr.rel (0) target = $region29
    $region28: #{_sublayer_2d.1} parent=1 // pred_region
      %s103 = ssub.s32 256, 256
      %104 = vsyncadd [#allocation4], %s103
      %s105 = sshll.u32 [#allocation7], 4
      %s106 = int_to_ptr.vmem [resolvable:$true] %s105
      %111 = dma.vmem_to_hbm [thread:$0]  %s106, 256, %s4, [#allocation4], 128, 128, 8
    $region29: #{_sublayer_2d.1} parent=1 // pred_fallthru
      _
    // Predicated region
    $region30: #{_sublayer_2d.1} parent=1 // pred_check
      _
    $region31: #{_sublayer_2d.1} parent=1 // pred_check_branch
      %113 = sbr.rel (0) target = $region33
    $region32: #{_sublayer_2d.1} parent=1 // pred_region
      %114 = dma.done [#allocation4], 256
    $region33: #{_sublayer_2d.1} parent=1 // pred_fallthru
      _
    %115 = vsyncpa [#allocation3], 1
    %116 = vsyncpa [#allocation6], 1
    %117 = vsyncpa [#allocation4], 1

</llo_original>
